<compile_context>
chip_gen: v7x
topology: tpu7x:2x2x1
jax: 0.10.0
libtpu: 0.0.40
codegen_flags: <defaults>
</compile_context>

<pallas_src>
import math

import jax
import jax.numpy as jnp
from jax.experimental import pallas as pl
from jax.experimental.pallas import tpu as pltpu

LEAKY_SLOPE = 0.01          # PyTorch nn.LeakyReLU default
FEA_DIM = 256               # local_fea_dim in the original model
MAX_TILE_N = 512


def _leaky(x):
    return jnp.where(x > 0, x, LEAKY_SLOPE * x)


def _round_up(v, m):
    return ((v + m - 1) // m) * m


def _pad_rows(x, n_pad):
    n = x.shape[0]
    if n == n_pad:
        return x
    pad = [(0, n_pad - n)] + [(0, 0)] * (x.ndim - 1)
    return jnp.pad(x, pad)


def _vmem_capacity():
    try:
        info = pltpu.get_tpu_info()
        for attr in ("vmem_capacity_bytes", "vmem_bytes", "vmem_capacity"):
            v = getattr(info, attr, None)
            if v:
                return int(v)
    except Exception:
        pass
    return 64 * 1024 * 1024          # conservative default (v7x)


# ---------------------------------------------------------------------------
# Small-dimension helpers: keep K=3 / J<=4 layers off the MXU (VPU / XLU).
# ---------------------------------------------------------------------------
def _small_in(x, w, b=None):
    """x:[n,K] @ w:[K,C] (K tiny) via VPU broadcast-FMAs."""
    k = w.shape[0]
    h = x[:, 0:1] * w[0:1, :]
    for j in range(1, k):
        h = h + x[:, j:j + 1] * w[j:j + 1, :]
    if b is not None:
        h = h + b
    return h


def _small_out(h, wt, b):
    """h:[n,C] @ w:[C,J] (J tiny, weight given transposed wt:[J,C]) via lane reduces."""
    j_out = wt.shape[0]
    cols = [jnp.sum(h * wt[j:j + 1, :], axis=-1, keepdims=True) for j in range(j_out)]
    return jnp.concatenate(cols, axis=-1) + b


def _const_index_map(zero, n_axes):
    if n_axes == 1:
        return lambda i: zero
    return lambda a, b: zero


def _const_specs(shapes, n_axes):
    return [pl.BlockSpec(shp, _const_index_map((0,) * len(shp), n_axes))
            for shp in shapes]


# ---------------------------------------------------------------------------
# Kernel 1: encoder stand-in (point-wise MLP 3 -> 64 -> 256), all frames at
# once over a (T, n_tiles) grid, bf16 output.
# ---------------------------------------------------------------------------
def _encoder_kernel(x_ref, w1_ref, b1_ref, w2_ref, b2_ref, o_ref):
    # TODO(synk): PC_Encoder source not provided; stand-in keeps every point and
    # lifts xyz -> 256-d features with a point-wise MLP.
    x = x_ref[0]                                             # [tile, 3]
    h = _leaky(_small_in(x, w1_ref[...], b1_ref[...]))       # 3 -> 64 on VPU
    o_ref[0] = (jnp.dot(h.astype(jnp.bfloat16), w2_ref[...],
                        preferred_element_type=jnp.float32)
                + b2_ref[...]).astype(o_ref.dtype)


# ---------------------------------------------------------------------------
# Kernel 2: fused LPT_raw (all frames) + multi-head attention over the frame
# axis (plain softmax, full-width per-head math) + coarse_re (+ last_xyz) and,
# when up_ratio == 1, the upsampler/detail_re/refiner stand-in as well.
# ---------------------------------------------------------------------------
def _make_predict_kernel(t, num_heads, hp, emit_detail, emit_fea):
    E = FEA_DIM
    dh = E // num_heads
    scale = 1.0 / math.sqrt(dh)
    q_idx = t - 1                    # query = most recent frame

    def kernel(*refs):
        fea_refs = refs[:t]                                  # t x [1, tn, E] bf16
        xyz_refs = refs[t:2 * t]                             # t x [tn, 3]  f32
        (wf, b_f, wp, wq, wk, wv, wo, bq, bk, bv, bo,
         hred, hexp, cw1, cb1, cw2t, cb2) = refs[2 * t:2 * t + 17]
        pos = 2 * t + 17
        if emit_detail:
            (uw, ub, dw1, db1, dw2t, db2, dw3t, db3, rwt, rb) = refs[pos:pos + 10]
            pos += 10
        out_slab = refs[pos]
        pos += 1
        if emit_fea:
            fea_out = refs[pos]
            pos += 1
        v_scr = refs[pos]                                    # [t, tn, E] bf16 scratch

        tn = out_slab.shape[0]
        last_fea = fea_refs[q_idx][0]                        # [tn, E] bf16
        last_xyz = xyz_refs[q_idx][...]                      # [tn, 3] f32
        wf_v = wf[...]
        bf_v = b_f[...]
        wp_v = wp[...]

        # TODO(synk): LPT_raw (kNN local aggregation) source not provided; stand-in
        # = leaky((f_i + f_last) @ Wf + (xyz_last - xyz_i) @ Wp + b), point-wise.
        def lpt(j):
            h = jnp.dot(fea_refs[j][0] + last_fea, wf_v,
                        preferred_element_type=jnp.float32) + bf_v
            h = h + _small_in(last_xyz - xyz_refs[j][...], wp_v)   # K=3 on VPU
            return _leaky(h)

        f_q = lpt(q_idx)
        q = (jnp.dot(f_q.astype(jnp.bfloat16), wq[...],
                     preferred_element_type=jnp.float32) + bq[...]) * scale

        hred_v = hred[...]                                   # [E, hp] head indicator
        hexp_v = hexp[...]                                   # [hp, E]

        # Pass 1: per-frame LPT + K/V; per-head scores via one full-width
        # [tn,E]@[E,hp] reduce matmul (no 64-lane head slicing, MXU-friendly).
        s_list = []
        for j in range(t):
            f_j = f_q if j == q_idx else lpt(j)
            f_b = f_j.astype(jnp.bfloat16)
            k_j = jnp.dot(f_b, wk[...], preferred_element_type=jnp.float32) + bk[...]
            v_j = jnp.dot(f_b, wv[...], preferred_element_type=jnp.float32) + bv[...]
            v_scr[j] = v_j.astype(jnp.bfloat16)
            s_list.append(jnp.dot(q * k_j, hred_v,
                                  preferred_element_type=jnp.float32))   # [tn, hp]

        # Plain softmax over the (small) frame axis, per head: a single wide exp.
        m = s_list[0]
        for s in s_list[1:]:
            m = jnp.maximum(m, s)
        p_all = jnp.exp(jnp.concatenate(s_list, axis=-1)
                        - jnp.concatenate([m] * t, axis=-1))             # [tn, hp*t]
        p_list = [p_all[:, j * hp:(j + 1) * hp] for j in range(t)]
        lsum = p_list[0]
        for pj in p_list[1:]:
            lsum = lsum + pj

        # Pass 2: weighted V accumulation, full-width via [tn,hp]@[hp,E] expansion.
        ctx = None
        for j in range(t):
            w_full = jnp.dot(p_list[j], hexp_v, preferred_element_type=jnp.float32)
            term = w_full * v_scr[j].astype(jnp.float32)
            ctx = term if ctx is None else ctx + term
        inv_full = jnp.dot(pl.reciprocal(lsum, approx=True), hexp_v,
                           preferred_element_type=jnp.float32)
        fea_next = jnp.dot((ctx * inv_full).astype(jnp.bfloat16), wo[...],
                           preferred_element_type=jnp.float32) + bo[...]

        # coarse_re: Linear(256,64) + LeakyReLU + Linear(64,3), residual last_xyz.
        hc = _leaky(jnp.dot(fea_next.astype(jnp.bfloat16), cw1[...],
                            preferred_element_type=jnp.float32) + cb1[...])
        coarse = _small_out(hc, cw2t[...], cb2[...]) + last_xyz

        if emit_detail:
            # TODO(synk): GeneralUpsampler / Refiner sources not provided; stand-in =
            # linear lift 256->C, detail_re MLP to xyz, plus a linear residual refiner.
            fu = _leaky(jnp.dot(fea_next.astype(jnp.bfloat16), uw[...],
                                preferred_element_type=jnp.float32) + ub[...])
            h1 = _leaky(jnp.dot(fu.astype(jnp.bfloat16), dw1[...],
                                preferred_element_type=jnp.float32) + db1[...])
            h2 = _leaky(_small_out(h1, dw2t[...], db2[...]))
            detail = (_small_out(h2, dw3t[...], db3[...])
                      + _small_out(fu, rwt[...], rb[...]))
        else:
            detail = jnp.zeros_like(coarse)

        # Lane-dense output slab: coarse xyz in lanes 0:3, detail xyz in lanes 3:6.
        pad = jnp.zeros((tn, 128 - 6), jnp.float32)
        out_slab[...] = jnp.concatenate([coarse, detail, pad], axis=-1)
        if emit_fea:
            fea_out[...] = fea_next.astype(fea_out.dtype)

    return kernel


# ---------------------------------------------------------------------------
# Kernel 3: separate upsampler + detail_re + refiner (only used when ratio > 1).
# ---------------------------------------------------------------------------
def _upsample_kernel(fea_ref, uw, ub, dw1, db1, dw2t, db2, dw3t, db3, rwt, rb, o_ref):
    # TODO(synk): GeneralUpsampler / Refiner stand-in (pos input ignored); point
    # replication handled by the grid's ratio axis (fea tile stays resident).
    fu = _leaky(jnp.dot(fea_ref[...], uw[...],
                        preferred_element_type=jnp.float32) + ub[...])
    h1 = _leaky(jnp.dot(fu.astype(jnp.bfloat16), dw1[...],
                        preferred_element_type=jnp.float32) + db1[...])
    h2 = _leaky(_small_out(h1, dw2t[...], db2[...]))
    det = _small_out(h2, dw3t[...], db3[...]) + _small_out(fu, rwt[...], rb[...])
    pad = jnp.zeros((det.shape[0], 128 - 3), jnp.float32)
    o_ref[...] = jnp.concatenate([det, pad], axis=-1)


# ---------------------------------------------------------------------------
# Model
# ---------------------------------------------------------------------------
class PCForecastKNNNot:
    _BASE_W = ["lpt_wf", "lpt_bf", "lpt_wp", "wq", "wk", "wv", "wo",
               "bq", "bk", "bv", "bo", "hred", "hexp", "cw1", "cb1", "cw2t", "cb2"]
    _UP_W = ["uw", "ub", "dw1", "db1", "dw2t", "db2", "dw3t", "db3", "rwt", "rb"]

    def __init__(self, encoder_args, att_args, upsampler_args, refiner_args, npoint, key):
        del encoder_args, refiner_args, npoint
        self.local_fea_dim = FEA_DIM
        self.num_heads = att_args["num_heads"]
        self.num_neighs = att_args["num_neighs"]
        self.head_pad = max(8, _round_up(self.num_heads, 8))
        self.up_channels = upsampler_args["out_channels"]
        self.up_ratio = upsampler_args.get("ratio", 1)
        self.params = self._init_params(key)
        self._call_cache = {}

    def _init_params(self, key):
        E, C = self.local_fea_dim, self.up_channels
        H, HP = self.num_heads, self.head_pad
        ks = jax.random.split(key, 16)
        w = lambda k, s: 0.05 * jax.random.normal(k, s, jnp.float32)
        z = lambda *s: jnp.zeros(s, jnp.float32)
        bf16 = jnp.bfloat16
        dh = E // H
        # head-block indicator used for the full-width per-head reduce / expand.
        hred = jnp.pad(jnp.repeat(jnp.eye(H, dtype=jnp.float32), dh, axis=0),
                       ((0, 0), (0, HP - H)))                 # [E, HP]
        return {
            # encoder stand-in (3 -> 64 -> 256)
            "enc_w1": w(ks[0], (3, 64)), "enc_b1": z(1, 64),
            "enc_w2": w(ks[1], (64, E)).astype(bf16), "enc_b2": z(1, E),
            # LPT_raw stand-in
            "lpt_wf": w(ks[2], (E, E)).astype(bf16), "lpt_bf": z(1, E),
            "lpt_wp": w(ks[3], (3, E)),
            # MultiheadAttention(256, num_heads)
            "wq": w(ks[4], (E, E)).astype(bf16), "wk": w(ks[5], (E, E)).astype(bf16),
            "wv": w(ks[6], (E, E)).astype(bf16), "wo": w(ks[7], (E, E)).astype(bf16),
            "bq": z(1, E), "bk": z(1, E), "bv": z(1, E), "bo": z(1, E),
            "hred": hred, "hexp": hred.T,
            # coarse_re
            "cw1": w(ks[8], (E, 64)).astype(bf16), "cb1": z(1, 64),
            "cw2t": w(ks[9], (3, 64)), "cb2": z(1, 3),
            # upsampler stand-in (256 -> C)
            "uw": w(ks[10], (E, C)).astype(bf16), "ub": z(1, C),
            # detail_re (C -> C/4 -> C/16 -> 3)
            "dw1": w(ks[11], (C, C // 4)).astype(bf16), "db1": z(1, C // 4),
            "dw2t": w(ks[12], (C // 16, C // 4)), "db2": z(1, C // 16),
            "dw3t": w(ks[13], (3, C // 16)), "db3": z(1, 3),
            # refiner stand-in (C -> 3, residual)
            "rwt": w(ks[14], (3, C)), "rb": z(1, 3),
        }

    # ---------------- tiling / VMEM sizing ----------------
    def _per_row_bytes(self, t):
        # double-buffered bf16 fea tiles + xyz tiles + bf16 V scratch
        # + ~10 live f32 [*, E] intermediates + output slab.
        return (t * (2 * FEA_DIM * 2 + 2 * 16 + FEA_DIM * 2)
                + 10 * FEA_DIM * 4 + 2 * 128 * 4)

    def _choose_tile(self, n, t):
        budget = max(4 << 20, min(_vmem_capacity() // 2, 40 << 20) - (2 << 20))
        cap = MAX_TILE_N
        while cap > 64 and cap * self._per_row_bytes(t) > budget:
            cap //= 2
        # Guarantee >=2 tiles along the parallel point axis when n allows
        # (v7x has 2 TensorCores; dimension_semantics="parallel" shards them).
        half = max(32, _round_up((n + 1) // 2, 32))
        return max(32, min(cap, half, _round_up(n, 32)))

    def _vmem_limit(self, tile_n, t):
        est = tile_n * self._per_row_bytes(t) + (3 << 20)
        return int(min(40 << 20, max(24 << 20, 2 * est)))

    # ---------------- encoder (all frames in one call) ----------------
    def _encode(self, xyz_stacked, tile_n):
        T, n_pad, _ = xyz_stacked.shape
        n_tiles = n_pad // tile_n
        key = ("enc", T, n_pad, tile_n)
        p = self.params
        if key not in self._call_cache:
            wshapes = [p["enc_w1"].shape, p["enc_b1"].shape,
                       p["enc_w2"].shape, p["enc_b2"].shape]
            fn = pl.pallas_call(
                _encoder_kernel,
                grid=(T, n_tiles),
                in_specs=[pl.BlockSpec((1, tile_n, 3), lambda f, i: (f, i, 0))]
                         + _const_specs(wshapes, 2),
                out_specs=pl.BlockSpec((1, tile_n, FEA_DIM), lambda f, i: (f, i, 0)),
                out_shape=jax.ShapeDtypeStruct((T, n_pad, FEA_DIM), jnp.bfloat16),
                compiler_params=pltpu.CompilerParams(
                    dimension_semantics=("parallel", "parallel")),
            )
            self._call_cache[key] = jax.jit(fn)
        return self._call_cache[key](xyz_stacked, p["enc_w1"], p["enc_b1"],
                                     p["enc_w2"], p["enc_b2"])

    # ---------------- fused LPT + MHA + coarse_re (+ detail when ratio==1) ----
    def _predict(self, fea_frames, xyz_frames, tile_n, fused):
        t = len(fea_frames)
        n_pad = xyz_frames[0].shape[0]
        n_tiles = n_pad // tile_n
        fis = tuple(fi for (_, fi) in fea_frames)
        wnames = list(self._BASE_W) + (list(self._UP_W) if fused else [])
        key = ("pred", t, n_pad, tile_n, fused, fis)
        p = self.params
        if key not in self._call_cache:
            fea_specs = [pl.BlockSpec((1, tile_n, FEA_DIM),
                                      (lambda i, _f=fi: (_f, i, 0))) for fi in fis]
            xyz_specs = [pl.BlockSpec((tile_n, 3), lambda i: (i, 0)) for _ in range(t)]
            w_specs = _const_specs([p[nm].shape for nm in wnames], 1)
            out_shape = [jax.ShapeDtypeStruct((n_pad, 128), jnp.float32)]
            out_specs = [pl.BlockSpec((tile_n, 128), lambda i: (i, 0))]
            if not fused:
                out_shape.append(jax.ShapeDtypeStruct((n_pad, FEA_DIM), jnp.bfloat16))
                out_specs.append(pl.BlockSpec((tile_n, FEA_DIM), lambda i: (i, 0)))
            fn = pl.pallas_call(
                _make_predict_kernel(t, self.num_heads, self.head_pad,
                                     emit_detail=fused, emit_fea=not fused),
                grid=(n_tiles,),
                in_specs=fea_specs + xyz_specs + w_specs,
                out_specs=out_specs[0] if fused else tuple(out_specs),
                out_shape=out_shape[0] if fused else tuple(out_shape),
                scratch_shapes=[pltpu.VMEM((t, tile_n, FEA_DIM), jnp.bfloat16)],
                compiler_params=pltpu.CompilerParams(
                    dimension_semantics=("parallel",),
                    vmem_limit_bytes=self._vmem_limit(tile_n, t)),
            )
            self._call_cache[key] = jax.jit(fn)
        args = ([arr for (arr, _) in fea_frames] + list(xyz_frames)
                + [p[nm] for nm in wnames])
        return self._call_cache[key](*args)

    # ---------------- separate upsample path (ratio > 1) ----------------
    def _upsample_refine(self, fea_pad, tile_n):
        n_pad = fea_pad.shape[0]
        n_tiles = n_pad // tile_n
        ratio = self.up_ratio
        key = ("up", n_pad, tile_n, ratio)
        p = self.params
        if key not in self._call_cache:
            wshapes = [p[nm].shape for nm in self._UP_W]
            fn = pl.pallas_call(
                _upsample_kernel,
                grid=(n_tiles, ratio),
                in_specs=[pl.BlockSpec((tile_n, FEA_DIM), lambda i, r: (i, 0))]
                         + _const_specs(wshapes, 2),
                out_specs=pl.BlockSpec((tile_n, 128),
                                       lambda i, r, _nt=n_tiles: (r * _nt + i, 0)),
                out_shape=jax.ShapeDtypeStruct((ratio * n_pad, 128), jnp.float32),
                compiler_params=pltpu.CompilerParams(
                    dimension_semantics=("parallel", "parallel")),
            )
            self._call_cache[key] = jax.jit(fn)
        return self._call_cache[key](fea_pad, *[p[nm] for nm in self._UP_W])

    # ---------------- forward ----------------
    def forward(self, input_xyz_list, num_pred):
        B, _, N = input_xyz_list[0].shape
        n = B * N
        L = len(input_xyz_list)
        t_final = L + num_pred - 1
        tile_n = self._choose_tile(n, t_final)
        n_pad = _round_up(n, tile_n)
        fused = (self.up_ratio == 1)
        # TODO(synk): batch boundaries (in_batch) are not enforced inside the
        # point-wise stand-ins; padded rows are sliced off after each kernel.

        xyz_frames = [_pad_rows(jnp.transpose(f, (0, 2, 1)).reshape(-1, 3), n_pad)
                      for f in input_xyz_list]
        enc0 = self._encode(jnp.stack(xyz_frames, axis=0), tile_n)   # [L,n_pad,E] bf16
        fea_frames = [(enc0, i) for i in range(L)]

        pred_coarse, pred_detail = [], []
        for step in range(num_pred):
            res = self._predict(fea_frames, xyz_frames, tile_n, fused)
            if fused:
                slab = res
                coarse = slab[:n, 0:3]
                detail = slab[:n, 3:6]
            else:
                slab, fea_next = res
                coarse = slab[:n, 0:3]
                det_slab = self._upsample_refine(fea_next, tile_n)
                detail = (det_slab[:, :3]
                          .reshape(self.up_ratio, n_pad, 3)[:, :n, :].reshape(-1, 3))
            pred_coarse.append(coarse)
            pred_detail.append(detail)

            if step + 1 < num_pred:
                # TODO(synk): PC_Encoder should re-sample to npoint; stand-in feeds
                # the first n predicted detail points back as the next frame.
                next_xyz = _pad_rows(detail[:n], n_pad)
                xyz_frames.append(next_xyz)
                enc_new = self._encode(next_xyz[None], tile_n)       # [1, n_pad, E]
                fea_frames.append((enc_new, 0))
        return pred_coarse, pred_detail


if __name__ == "__main__":
    key = jax.random.PRNGKey(0)
    kparam, kdata = jax.random.split(key)

    encoder_args = {}
    att_args = {"num_heads": 4, "num_neighs": 8}
    upsampler_args = {"out_channels": 64, "ratio": 1}
    refiner_args = {}
    npoint = 64

    model = PCForecastKNNNot(encoder_args, att_args, upsampler_args,
                             refiner_args, npoint, kparam)

    B, N = 2, 64
    n_frames = 3
    frame_keys = jax.random.split(kdata, n_frames)
    input_xyz_list = [jax.random.normal(frame_keys[i], (B, 3, N), jnp.float32)
                      for i in range(n_frames)]

    pred_coarse, pred_detail = model.forward(input_xyz_list, num_pred=2)
    jax.block_until_ready(pred_coarse)
    jax.block_until_ready(pred_detail)

    assert len(pred_coarse) == 2 and len(pred_detail) == 2
    assert pred_coarse[0].shape == (B * N, 3)
    assert pred_detail[0].shape == (B * N * upsampler_args["ratio"], 3)
    for arr in pred_coarse + pred_detail:
        assert bool(jnp.all(jnp.isfinite(arr)))
    print("KERNEL_OK")
</pallas_src>

<mosaic_0001>
module attributes {stable_mosaic.version = 11 : i64} {
  func.func @_encoder_kernel(%arg0: i32, %arg1: i32, %arg2: memref<1x64x3xf32, #tpu.memory_space<vmem>>, %arg3: memref<3x64xf32, #tpu.memory_space<vmem>>, %arg4: memref<1x64xf32, #tpu.memory_space<vmem>>, %arg5: memref<64x256xbf16, #tpu.memory_space<vmem>>, %arg6: memref<1x256xf32, #tpu.memory_space<vmem>>, %arg7: memref<1x64x256xbf16, #tpu.memory_space<vmem>>) attributes {dimension_semantics = [#tpu.dimension_semantics<parallel>, #tpu.dimension_semantics<parallel>], iteration_bounds = array<i64: 3, 2>, scalar_prefetch = 0 : i64, scratch_operands = 0 : i64, tpu.core_type = #tpu.core_type<tc>, window_params = [{transform_indices = @transform_0, window_bounds = array<i64: 1, 64, 3>}, {pipeline_mode = #tpu.pipeline_mode<synchronous>, transform_indices = @transform_1, window_bounds = array<i64: 3, 64>}, {pipeline_mode = #tpu.pipeline_mode<synchronous>, transform_indices = @transform_2, window_bounds = array<i64: 1, 64>}, {pipeline_mode = #tpu.pipeline_mode<synchronous>, transform_indices = @transform_3, window_bounds = array<i64: 64, 256>}, {pipeline_mode = #tpu.pipeline_mode<synchronous>, transform_indices = @transform_4, window_bounds = array<i64: 1, 256>}, {transform_indices = @transform_5, window_bounds = array<i64: 1, 64, 256>}]} {
    %c0 = arith.constant 0 : index
    %c0_0 = arith.constant 0 : index
    %c0_1 = arith.constant 0 : index
    %0 = vector.load %arg2[%c0, %c0_0, %c0_1] : memref<1x64x3xf32, #tpu.memory_space<vmem>>, vector<1x64x3xf32>
    %1 = vector.shape_cast %0 : vector<1x64x3xf32> to vector<64x3xf32>
    %c0_2 = arith.constant 0 : index
    %c0_3 = arith.constant 0 : index
    %2 = vector.load %arg3[%c0_2, %c0_3] : memref<3x64xf32, #tpu.memory_space<vmem>>, vector<3x64xf32>
    %c0_4 = arith.constant 0 : index
    %c0_5 = arith.constant 0 : index
    %3 = vector.load %arg4[%c0_4, %c0_5] : memref<1x64xf32, #tpu.memory_space<vmem>>, vector<1x64xf32>
    %4 = vector.extract_strided_slice %1 {offsets = [0, 0], sizes = [64, 1], strides = [1, 1]} : vector<64x3xf32> to vector<64x1xf32>
    %5 = vector.extract_strided_slice %2 {offsets = [0, 0], sizes = [1, 64], strides = [1, 1]} : vector<3x64xf32> to vector<1x64xf32>
    %6 = vector.broadcast %4 : vector<64x1xf32> to vector<64x64xf32>
    %7 = vector.broadcast %5 : vector<1x64xf32> to vector<64x64xf32>
    %8 = arith.mulf %6, %7 : vector<64x64xf32>
    %9 = vector.extract_strided_slice %1 {offsets = [0, 1], sizes = [64, 1], strides = [1, 1]} : vector<64x3xf32> to vector<64x1xf32>
    %10 = vector.extract_strided_slice %2 {offsets = [1, 0], sizes = [1, 64], strides = [1, 1]} : vector<3x64xf32> to vector<1x64xf32>
    %11 = vector.broadcast %9 : vector<64x1xf32> to vector<64x64xf32>
    %12 = vector.broadcast %10 : vector<1x64xf32> to vector<64x64xf32>
    %13 = arith.mulf %11, %12 : vector<64x64xf32>
    %14 = arith.addf %8, %13 : vector<64x64xf32>
    %15 = vector.extract_strided_slice %1 {offsets = [0, 2], sizes = [64, 1], strides = [1, 1]} : vector<64x3xf32> to vector<64x1xf32>
    %16 = vector.extract_strided_slice %2 {offsets = [2, 0], sizes = [1, 64], strides = [1, 1]} : vector<3x64xf32> to vector<1x64xf32>
    %17 = vector.broadcast %15 : vector<64x1xf32> to vector<64x64xf32>
    %18 = vector.broadcast %16 : vector<1x64xf32> to vector<64x64xf32>
    %19 = arith.mulf %17, %18 : vector<64x64xf32>
    %20 = arith.addf %14, %19 : vector<64x64xf32>
    %21 = vector.broadcast %3 : vector<1x64xf32> to vector<64x64xf32>
    %22 = arith.addf %20, %21 : vector<64x64xf32>
    %cst = arith.constant 0.000000e+00 : f32
    %23 = vector.broadcast %cst : f32 to vector<64x64xf32>
    %24 = arith.cmpf ogt, %22, %23 : vector<64x64xf32>
    %cst_6 = arith.constant 0.00999999977 : f32
    %25 = vector.broadcast %cst_6 : f32 to vector<64x64xf32>
    %26 = arith.mulf %25, %22 : vector<64x64xf32>
    %27 = arith.select %24, %22, %26 : vector<64x64xi1>, vector<64x64xf32>
    %28 = arith.truncf %27 : vector<64x64xf32> to vector<64x64xbf16>
    %c0_7 = arith.constant 0 : index
    %c0_8 = arith.constant 0 : index
    %29 = vector.load %arg5[%c0_7, %c0_8] : memref<64x256xbf16, #tpu.memory_space<vmem>>, vector<64x256xbf16>
    %cst_9 = arith.constant dense<0.000000e+00> : vector<64x256xf32>
    %30 = tpu.matmul %28, %29, %cst_9 {dimension_numbers = #tpu.dot_dimension_numbers<[1], [0], [0], [1], [0, 0, 1, 1], [], []>} : vector<64x64xbf16>, vector<64x256xbf16>, vector<64x256xf32> -> vector<64x256xf32>
    %c0_10 = arith.constant 0 : index
    %c0_11 = arith.constant 0 : index
    %31 = vector.load %arg6[%c0_10, %c0_11] : memref<1x256xf32, #tpu.memory_space<vmem>>, vector<1x256xf32>
    %32 = vector.broadcast %31 : vector<1x256xf32> to vector<64x256xf32>
    %33 = arith.addf %30, %32 : vector<64x256xf32>
    %34 = arith.truncf %33 : vector<64x256xf32> to vector<64x256xbf16>
    %c0_12 = arith.constant 0 : index
    %c0_13 = arith.constant 0 : index
    %c0_14 = arith.constant 0 : index
    %35 = vector.load %arg7[%c0_12, %c0_13, %c0_14] : memref<1x64x256xbf16, #tpu.memory_space<vmem>>, vector<1x64x256xbf16>
    %36 = vector.shape_cast %35 : vector<1x64x256xbf16> to vector<64x256xbf16>
    %37 = vector.shape_cast %34 : vector<64x256xbf16> to vector<1x64x256xbf16>
    tpu.vector_store %arg7[%c0_12, %c0_13, %c0_14], %37 {strides = array<i32>} : memref<1x64x256xbf16, #tpu.memory_space<vmem>>, vector<1x64x256xbf16>,
    return
  }
  func.func @transform_0(%arg0: i32, %arg1: i32) -> (i32, i32, i32) {
    %c0_i32 = arith.constant 0 : i32
    %c0_i32_0 = arith.constant 0 : i32
    return %arg0, %arg1, %c0_i32 : i32, i32, i32
  }
  func.func @transform_1(%arg0: i32, %arg1: i32) -> (i32, i32) {
    %c0_i32 = arith.constant 0 : i32
    %c0_i32_0 = arith.constant 0 : i32
    %c0_i32_1 = arith.constant 0 : i32
    return %c0_i32, %c0_i32_0 : i32, i32
  }
  func.func @transform_2(%arg0: i32, %arg1: i32) -> (i32, i32) {
    %c0_i32 = arith.constant 0 : i32
    %c0_i32_0 = arith.constant 0 : i32
    %c0_i32_1 = arith.constant 0 : i32
    return %c0_i32, %c0_i32_0 : i32, i32
  }
  func.func @transform_3(%arg0: i32, %arg1: i32) -> (i32, i32) {
    %c0_i32 = arith.constant 0 : i32
    %c0_i32_0 = arith.constant 0 : i32
    %c0_i32_1 = arith.constant 0 : i32
    return %c0_i32, %c0_i32_0 : i32, i32
  }
  func.func @transform_4(%arg0: i32, %arg1: i32) -> (i32, i32) {
    %c0_i32 = arith.constant 0 : i32
    %c0_i32_0 = arith.constant 0 : i32
    %c0_i32_1 = arith.constant 0 : i32
    return %c0_i32, %c0_i32_0 : i32, i32
  }
  func.func @transform_5(%arg0: i32, %arg1: i32) -> (i32, i32, i32) {
    %c0_i32 = arith.constant 0 : i32
    %c0_i32_0 = arith.constant 0 : i32
    return %arg0, %arg1, %c0_i32 : i32, i32, i32
  }
}

</mosaic_0001>

<llo_original>
// kernel: tpu_custom_call.1
$region0: #{tpu_custom_call.1}
  #allocation0 [shape = 'u32[]', space=smem, size = 0x4, offset = 0x4, fixed_abs, tag = 'smem constant byte address 0x4 - core index']
  #allocation1 [shape = 'u32[144,128]{1,0:T(1,128)}', space=vmem, size = 0x12000, scoped, tag = 'internal scratch']
  %s0 = inlined_call_operand.vmem [shape: f32[3,128,3], index: 0, kind: input, shape index: {}]
  %s1 = inlined_call_operand.vmem [shape: f32[3,64], index: 1, kind: input, shape index: {}]
  %s2 = inlined_call_operand.vmem [shape: f32[1,64], index: 2, kind: input, shape index: {}]
  %s3 = inlined_call_operand.vmem [shape: bf16[64,256], index: 3, kind: input, shape index: {}]
  %s4 = inlined_call_operand.vmem [shape: f32[1,256], index: 4, kind: input, shape index: {}]
  %s5 = inlined_call_operand.hbm [shape: bf16[3,128,256], index: 5, kind: output, shape index: {}]
  %s6 = sld [smem:[#allocation0]]
  $region53: #{tpu_custom_call.1} parent=0
    _
  %s8 = ssub.s32 1, %s6
  %s9 = scalar_select 0, %s8, %s6
  $region1: #{tpu_custom_call.1} parent=0
    #allocation2 [shape = 'u8[65536]{0}', space=vmem, size = 0x10000, scoped, tag = 'output window, operand 0']
    #allocation3 [shape = 's32[2]{0}', space=sflag, size = 0x8, scoped, tag = 'scoped memory for tpu_custom_call.1']
    %10 = vsyncpa [#allocation3], 0
    %s11 = scalar_lea.sflag [#allocation3], 1
    %12 = vsyncpa %s11, 0
    loop: start=0, step=1, limit=8
    $region2: #{tpu_custom_call.1} parent=1 // loop_pre_header
      _
    $region3: #{tpu_custom_call.1} parent=1 // loop_header
      %s14 = sphi 0, %s18
      %p15 = scmp.ge.s32.totalorder %s14, 8
      %s21 = sphi 0, %s33
      %s22 = sphi 0, %s29
      %s23 = sphi 0, %s21
      %s24 = sphi 0, %s22
      %s25 = sphi 0, %s23
      %s26 = sphi 0, %s24
      %s38 = sphi 0, %s40
      %s41 = sphi 0, %s38
      %s42 = sphi 0, %s41
      %s58 = sphi 0, %s42
      %s62 = sphi 0, %s62
      %s64 = sphi 0, %s62
      %s65 = sphi 0, %s64
      %s79 = sphi 0, %s65
      %s83 = sphi 0, %s83
      %s85 = sphi 0, %s83
      %s86 = sphi 0, %s85
      %s100 = sphi 0, %s86
      %s104 = sphi 0, %s104
      %s106 = sphi 0, %s104
      %s107 = sphi 0, %s106
      %s121 = sphi 0, %s107
      %s125 = sphi 0, %s125
      %s127 = sphi 0, %s125
      %s128 = sphi 0, %s127
      %s142 = sphi 0, %s128
      %s150 = sphi 0, %s152
      %s153 = sphi 0, %s150
      %s154 = sphi 0, %s153
      %s170 = sphi 0, %s154
    $region4: #{tpu_custom_call.1} parent=1 // loop_header_branch
      %17 = sbr.rel (%p15) target = $region8
    $region5: #{tpu_custom_call.1} parent=1 // loop_body
      %s19 = ssub.s32 %s14, 1
      %s20 = ssub.s32 %s14, 2
      %s27 = sadd.s32 1, %s22
      %p28 = scmp.ge.s32.totalorder %s27, 2
      %s29 = scalar_select %p28, 0, %s27
      %s30 = sadd.s32 1, %s21
      %s31 = scalar_select %p28, %s30, %s21
      %p32 = scmp.ge.s32.totalorder %s31, 3
      %s33 = scalar_select %p32, 0, %s31
      %s34 = ssub.s32 %s21, %s33
      %s35 = ssub.s32 %s22, %s29
      %s36 = sor.u32 %s34, %s35
      %p37 = scmp.eq.s32.totalorder %s36, 0
      %s39 = sadd.s32 %s38, 1
      %s40 = scalar_select %p37, %s38, %s39
      %p43 = pneg %p37
      %p44 = scmp.eq.s32.totalorder %s14, 5
      %p45 = por %p43, %p44
      %p46 = scmp.ne.s32.totalorder %s38, %s41
      %p47 = scmp.eq.s32.totalorder %s14, 0
      %p48 = por %p46, %p47
      %p49 = scmp.ne.s32.totalorder %s38, %s41
      %p50 = scmp.eq.s32.totalorder %s19, 5
      %p51 = por %p49, %p50
      %p52 = scmp.ne.s32.totalorder %s41, %s42
      %p53 = scmp.eq.s32.totalorder %s19, 0
      %p54 = por %p52, %p53
      %p55 = scmp.ne.s32.totalorder %s41, %s42
      %p56 = scmp.eq.s32.totalorder %s20, 5
      %p57 = por %p55, %p56
      %p59 = scmp.ne.s32.totalorder %s42, %s58
      %p60 = scmp.eq.s32.totalorder %s20, 0
      %p61 = por %p59, %p60
      %s63 = sadd.s32 %s62, 1
      %p66 = scmp.eq.s32.totalorder %s14, 5
      %p67 = scmp.ne.s32.totalorder %s62, %s64
      %p68 = scmp.eq.s32.totalorder %s14, 0
      %p69 = por %p67, %p68
      %p70 = scmp.ne.s32.totalorder %s62, %s64
      %p71 = scmp.eq.s32.totalorder %s19, 5
      %p72 = por %p70, %p71
      %p73 = scmp.ne.s32.totalorder %s64, %s65
      %p74 = scmp.eq.s32.totalorder %s19, 0
      %p75 = por %p73, %p74
      %p76 = scmp.ne.s32.totalorder %s64, %s65
      %p77 = scmp.eq.s32.totalorder %s20, 5
      %p78 = por %p76, %p77
      %p80 = scmp.ne.s32.totalorder %s65, %s79
      %p81 = scmp.eq.s32.totalorder %s20, 0
      %p82 = por %p80, %p81
      %s84 = sadd.s32 %s83, 1
      %p87 = scmp.eq.s32.totalorder %s14, 5
      %p88 = scmp.ne.s32.totalorder %s83, %s85
      %p89 = scmp.eq.s32.totalorder %s14, 0
      %p90 = por %p88, %p89
      %p91 = scmp.ne.s32.totalorder %s83, %s85
      %p92 = scmp.eq.s32.totalorder %s19, 5
      %p93 = por %p91, %p92
      %p94 = scmp.ne.s32.totalorder %s85, %s86
      %p95 = scmp.eq.s32.totalorder %s19, 0
      %p96 = por %p94, %p95
      %p97 = scmp.ne.s32.totalorder %s85, %s86
      %p98 = scmp.eq.s32.totalorder %s20, 5
      %p99 = por %p97, %p98
      %p101 = scmp.ne.s32.totalorder %s86, %s100
      %p102 = scmp.eq.s32.totalorder %s20, 0
      %p103 = por %p101, %p102
      %s105 = sadd.s32 %s104, 1
      %p108 = scmp.eq.s32.totalorder %s14, 5
      %p109 = scmp.ne.s32.totalorder %s104, %s106
      %p110 = scmp.eq.s32.totalorder %s14, 0
      %p111 = por %p109, %p110
      %p112 = scmp.ne.s32.totalorder %s104, %s106
      %p113 = scmp.eq.s32.totalorder %s19, 5
      %p114 = por %p112, %p113
      %p115 = scmp.ne.s32.totalorder %s106, %s107
      %p116 = scmp.eq.s32.totalorder %s19, 0
      %p117 = por %p115, %p116
      %p118 = scmp.ne.s32.totalorder %s106, %s107
      %p119 = scmp.eq.s32.totalorder %s20, 5
      %p120 = por %p118, %p119
      %p122 = scmp.ne.s32.totalorder %s107, %s121
      %p123 = scmp.eq.s32.totalorder %s20, 0
      %p124 = por %p122, %p123
      %s126 = sadd.s32 %s125, 1
      %p129 = scmp.eq.s32.totalorder %s14, 5
      %p130 = scmp.ne.s32.totalorder %s125, %s127
      %p131 = scmp.eq.s32.totalorder %s14, 0
      %p132 = por %p130, %p131
      %p133 = scmp.ne.s32.totalorder %s125, %s127
      %p134 = scmp.eq.s32.totalorder %s19, 5
      %p135 = por %p133, %p134
      %p136 = scmp.ne.s32.totalorder %s127, %s128
      %p137 = scmp.eq.s32.totalorder %s19, 0
      %p138 = por %p136, %p137
      %p139 = scmp.ne.s32.totalorder %s127, %s128
      %p140 = scmp.eq.s32.totalorder %s20, 5
      %p141 = por %p139, %p140
      %p143 = scmp.ne.s32.totalorder %s128, %s142
      %p144 = scmp.eq.s32.totalorder %s20, 0
      %p145 = por %p143, %p144
      %s146 = ssub.s32 %s21, %s33
      %s147 = ssub.s32 %s22, %s29
      %s148 = sor.u32 %s146, %s147
      %p149 = scmp.eq.s32.totalorder %s148, 0
      %s151 = sadd.s32 %s150, 1
      %s152 = scalar_select %p149, %s150, %s151
      %p155 = pneg %p149
      %p156 = scmp.eq.s32.totalorder %s14, 5
      %p157 = por %p155, %p156
      %p158 = scmp.ne.s32.totalorder %s150, %s153
      %p159 = scmp.eq.s32.totalorder %s14, 0
      %p160 = por %p158, %p159
      %p161 = scmp.ne.s32.totalorder %s150, %s153
      %p162 = scmp.eq.s32.totalorder %s19, 5
      %p163 = por %p161, %p162
      %p164 = scmp.ne.s32.totalorder %s153, %s154
      %p165 = scmp.eq.s32.totalorder %s19, 0
      %p166 = por %p164, %p165
      %p167 = scmp.ne.s32.totalorder %s153, %s154
      %p168 = scmp.eq.s32.totalorder %s20, 5
      %p169 = por %p167, %p168
      %p171 = scmp.ne.s32.totalorder %s154, %s170
      %p172 = scmp.eq.s32.totalorder %s20, 0
      %p173 = por %p171, %p172
      %p174 = scmp.le.s32.totalorder 1, %s14
      %p175 = scmp.lt.s32.totalorder %s14, 7
      %p176 = pnand %p174, %p175
      %p177 = pneg %p176
      // Predicated region
      $region9: #{tpu_custom_call.1} parent=5 // pred_check
        _
      $region10: #{tpu_custom_call.1} parent=5 // pred_check_branch
        %179 = sbr.rel (%p176) target = $region12
      $region11: #{tpu_custom_call.1} parent=5 // pred_region
        %s180 = ssub.s32 %s14, 1
        // Predicated region
        $region13: #{tpu_custom_call.1} parent=11 // pred_check
          %p181 = pneg %p75
        $region14: #{tpu_custom_call.1} parent=11 // pred_check_branch
          %183 = sbr.rel (%p181) target = $region16
        $region15: #{tpu_custom_call.1} parent=11 // pred_region
          _
        $region16: #{tpu_custom_call.1} parent=11 // pred_fallthru
          _
        // Predicated region
        $region17: #{tpu_custom_call.1} parent=11 // pred_check
          %p184 = pneg %p96
        $region18: #{tpu_custom_call.1} parent=11 // pred_check_branch
          %186 = sbr.rel (%p184) target = $region20
        $region19: #{tpu_custom_call.1} parent=11 // pred_region
          _
        $region20: #{tpu_custom_call.1} parent=11 // pred_fallthru
          _
        // Predicated region
        $region21: #{tpu_custom_call.1} parent=11 // pred_check
          %p187 = pneg %p117
        $region22: #{tpu_custom_call.1} parent=11 // pred_check_branch
          %189 = sbr.rel (%p187) target = $region24
        $region23: #{tpu_custom_call.1} parent=11 // pred_region
          _
        $region24: #{tpu_custom_call.1} parent=11 // pred_fallthru
          _
        // Predicated region
        $region25: #{tpu_custom_call.1} parent=11 // pred_check
          %p190 = pneg %p138
        $region26: #{tpu_custom_call.1} parent=11 // pred_check_branch
          %192 = sbr.rel (%p190) target = $region28
        $region27: #{tpu_custom_call.1} parent=11 // pred_region
          _
        $region28: #{tpu_custom_call.1} parent=11 // pred_fallthru
          _
      $region12: #{tpu_custom_call.1} parent=5 // pred_fallthru
        _
      %p193 = scmp.lt.s32.totalorder %s14, 6
      // Predicated region
      $region29: #{tpu_custom_call.1} parent=5 // pred_check
        %p194 = pneg %p193
      $region30: #{tpu_custom_call.1} parent=5 // pred_check_branch
        %196 = sbr.rel (%p194) target = $region32
      $region31: #{tpu_custom_call.1} parent=5 // pred_region
        // Predicated region
        $region33: #{tpu_custom_call.1} parent=31 // pred_check
          %p197 = pneg %p48
        $region34: #{tpu_custom_call.1} parent=31 // pred_check_branch
          %199 = sbr.rel (%p197) target = $region36
        $region35: #{tpu_custom_call.1} parent=31 // pred_region
          %s200 = smul.u32 8, %s22
          %p201 = scmp.lt.s32.totalorder %s21, 2
          %s202 = scalar_select %p201, %s21, 2
          %p203 = scmp.lt.s32.totalorder %s200, 15
          %s204 = scalar_select %p203, %s200, 15
          %s205 = smul.addr %s202, 16
          %s206 = sadd.s32 %s204, %s205
          %s207 = smul.addr %s206, 8
          %s208 = scalar_lea.vmem %s0, %s207
          %s209 = smul.u32 8, %s22
        $region36: #{tpu_custom_call.1} parent=31 // pred_fallthru
          _
      $region32: #{tpu_custom_call.1} parent=5 // pred_fallthru
        _
      %p210 = scmp.le.s32.totalorder 1, %s14
      %p211 = scmp.lt.s32.totalorder %s14, 7
      %p212 = pnand %p210, %p211
      %p213 = pneg %p212
      // Predicated region
      $region37: #{tpu_custom_call.1} parent=5 // pred_check
        _
      $region38: #{tpu_custom_call.1} parent=5 // pred_check_branch
        %215 = sbr.rel (%p212) target = $region40
      $region39: #{tpu_custom_call.1} parent=5 // pred_region
        %s216 = ssub.s32 %s14, 1
        %s217 = smul.u32 8, %s24
        %p218 = scmp.lt.s32.totalorder %s23, 2
        %s219 = scalar_select %p218, %s23, 2
        %p220 = scmp.lt.s32.totalorder %s217, 15
        %s221 = scalar_select %p220, %s217, 15
        %s222 = smul.addr %s219, 16
        %s223 = sadd.s32 %s221, %s222
        %s224 = smul.addr %s223, 8
        %s225 = scalar_lea.vmem %s0, %s224
        %p226 = pneg %p54
        %p227 = pneg %p51
        %p228 = pneg %p75
        %p229 = pneg %p72
        %p230 = pneg %p96
        %p231 = pneg %p93
        %p232 = pneg %p117
        %p233 = pneg %p114
        %p234 = pneg %p138
        %p235 = pneg %p135
        %p236 = pneg %p166
        %p237 = pneg %p163
        %s238 = sand.u32 %s153, 1
        %s239 = scalar_lea.sflag [#allocation3], %s238
        %s240 = sand.u32 %s153, 1
        %s241 = smul.addr %s240, 64
        %s242 = scalar_lea.vmem [#allocation2], %s241
        %s243 = smul.u32 8, %s24
        %p244 = scmp.lt.s32.totalorder %s23, 2
        %s245 = scalar_select %p244, %s23, 2
        %p246 = scmp.lt.s32.totalorder %s243, 15
        %s247 = scalar_select %p246, %s243, 15
        %s248 = smul.addr %s245, 16
        %s249 = sadd.s32 %s247, %s248
        %s250 = smul.addr %s249, 8
        %s251 = scalar_lea.vmem %s0, %s250
        %s252 = smul.u32 8, %s24
        %s253 = smul.u32 8, %s24
        %v255 = vld [vmem:[%s251] sm:$0xff]
        %v256 = vld [vmem:[%s251 + $0x8] sm:$0xff]
        %v257 = vld [vmem:[%s251 + $0x10] sm:$0xff]
        %v258 = vld [vmem:[%s251 + $0x18] sm:$0xff]
        %v259 = vld [vmem:[%s251 + $0x20] sm:$0xff]
        %v260 = vld [vmem:[%s251 + $0x28] sm:$0xff]
        %v261 = vld [vmem:[%s251 + $0x30] sm:$0xff]
        %v262 = vld [vmem:[%s251 + $0x38] sm:$0xff]
        %v263 = vld [vmem:[%s1] sm:$0x7]
        %v264 = vld [vmem:[%s2] sm:$0x1]
        %266 = vset.pattern.permute.xlu0 0
        %267 = vperm.xlu0 %266, %v255
        %v268 = vpop.permute.xlu0 %267
        %271 = vset.pattern.permute.xlu0 0
        %272 = vperm.xlu0 %271, %v256
        %v273 = vpop.permute.xlu0 %272
        %276 = vset.pattern.permute.xlu0 0
        %277 = vperm.xlu0 %276, %v257
        %v278 = vpop.permute.xlu0 %277
        %281 = vset.pattern.permute.xlu0 0
        %282 = vperm.xlu0 %281, %v258
        %v283 = vpop.permute.xlu0 %282
        %286 = vset.pattern.permute.xlu0 0
        %287 = vperm.xlu0 %286, %v259
        %v288 = vpop.permute.xlu0 %287
        %291 = vset.pattern.permute.xlu0 0
        %292 = vperm.xlu0 %291, %v260
        %v293 = vpop.permute.xlu0 %292
        %296 = vset.pattern.permute.xlu0 0
        %297 = vperm.xlu0 %296, %v261
        %v298 = vpop.permute.xlu0 %297
        %301 = vset.pattern.permute.xlu0 0
        %302 = vperm.xlu0 %301, %v262
        %v303 = vpop.permute.xlu0 %302
        %v305 = vlaneseq
        %v306 = vshrl.u32 %v305, 7
        %v307 = vsub.s32 0, %v306
        %v308 = vrot.slane %v263, %v307
        %v309 = vmul.f32 %v268, %v308
        %v310 = vmul.f32 %v273, %v308
        %v311 = vmul.f32 %v278, %v308
        %v312 = vmul.f32 %v283, %v308
        %v313 = vmul.f32 %v288, %v308
        %v314 = vmul.f32 %v293, %v308
        %v315 = vmul.f32 %v298, %v308
        %v316 = vmul.f32 %v303, %v308
        %317 = vset.pattern.permute.xlu0 1
        %318 = vperm.xlu0 %317, %v255
        %v319 = vpop.permute.xlu0 %318
        %321 = vset.pattern.permute.xlu0 1
        %322 = vperm.xlu0 %321, %v256
        %v323 = vpop.permute.xlu0 %322
        %325 = vset.pattern.permute.xlu0 1
        %326 = vperm.xlu0 %325, %v257
        %v327 = vpop.permute.xlu0 %326
        %329 = vset.pattern.permute.xlu0 1
        %330 = vperm.xlu0 %329, %v258
        %v331 = vpop.permute.xlu0 %330
        %333 = vset.pattern.permute.xlu0 1
        %334 = vperm.xlu0 %333, %v259
        %v335 = vpop.permute.xlu0 %334
        %337 = vset.pattern.permute.xlu0 1
        %338 = vperm.xlu0 %337, %v260
        %v339 = vpop.permute.xlu0 %338
        %341 = vset.pattern.permute.xlu0 1
        %342 = vperm.xlu0 %341, %v261
        %v343 = vpop.permute.xlu0 %342
        %345 = vset.pattern.permute.xlu0 1
        %346 = vperm.xlu0 %345, %v262
        %v347 = vpop.permute.xlu0 %346
        %v349 = vlaneseq
        %v350 = vshrl.u32 %v349, 7
        %v351 = vsub.s32 1, %v350
        %v352 = vrot.slane %v263, %v351
        %v353 = vmul.f32 %v319, %v352
        %v354 = vmul.f32 %v323, %v352
        %v355 = vmul.f32 %v327, %v352
        %v356 = vmul.f32 %v331, %v352
        %v357 = vmul.f32 %v335, %v352
        %v358 = vmul.f32 %v339, %v352
        %v359 = vmul.f32 %v343, %v352
        %v360 = vmul.f32 %v347, %v352
        %v361 = vadd.f32 %v309, %v353
        %v362 = vadd.f32 %v310, %v354
        %v363 = vadd.f32 %v311, %v355
        %v364 = vadd.f32 %v312, %v356
        %v365 = vadd.f32 %v313, %v357
        %v366 = vadd.f32 %v314, %v358
        %v367 = vadd.f32 %v315, %v359
        %v368 = vadd.f32 %v316, %v360
        %369 = vset.pattern.permute.xlu0 2
        %370 = vperm.xlu0 %369, %v255
        %v371 = vpop.permute.xlu0 %370
        %373 = vset.pattern.permute.xlu0 2
        %374 = vperm.xlu0 %373, %v256
        %v375 = vpop.permute.xlu0 %374
        %377 = vset.pattern.permute.xlu0 2
        %378 = vperm.xlu0 %377, %v257
        %v379 = vpop.permute.xlu0 %378
        %381 = vset.pattern.permute.xlu0 2
        %382 = vperm.xlu0 %381, %v258
        %v383 = vpop.permute.xlu0 %382
        %385 = vset.pattern.permute.xlu0 2
        %386 = vperm.xlu0 %385, %v259
        %v387 = vpop.permute.xlu0 %386
        %389 = vset.pattern.permute.xlu0 2
        %390 = vperm.xlu0 %389, %v260
        %v391 = vpop.permute.xlu0 %390
        %393 = vset.pattern.permute.xlu0 2
        %394 = vperm.xlu0 %393, %v261
        %v395 = vpop.permute.xlu0 %394
        %397 = vset.pattern.permute.xlu0 2
        %398 = vperm.xlu0 %397, %v262
        %v399 = vpop.permute.xlu0 %398
        %v401 = vlaneseq
        %v402 = vshrl.u32 %v401, 7
        %v403 = vsub.s32 2, %v402
        %v404 = vrot.slane %v263, %v403
        %v405 = vmul.f32 %v371, %v404
        %v406 = vmul.f32 %v375, %v404
        %v407 = vmul.f32 %v379, %v404
        %v408 = vmul.f32 %v383, %v404
        %v409 = vmul.f32 %v387, %v404
        %v410 = vmul.f32 %v391, %v404
        %v411 = vmul.f32 %v395, %v404
        %v412 = vmul.f32 %v399, %v404
        %v413 = vadd.f32 %v361, %v405
        %v414 = vadd.f32 %v362, %v406
        %v415 = vadd.f32 %v363, %v407
        %v416 = vadd.f32 %v364, %v408
        %v417 = vadd.f32 %v365, %v409
        %v418 = vadd.f32 %v366, %v410
        %v419 = vadd.f32 %v367, %v411
        %v420 = vadd.f32 %v368, %v412
        %v422 = vlaneseq
        %v423 = vshrl.u32 %v422, 7
        %v424 = vsub.s32 0, %v423
        %v425 = vrot.slane %v264, %v424
        %v427 = vadd.f32 %v413, %v425
        %v428 = vadd.f32 %v414, %v425
        %v429 = vadd.f32 %v415, %v425
        %v430 = vadd.f32 %v416, %v425
        %v431 = vadd.f32 %v417, %v425
        %v432 = vadd.f32 %v418, %v425
        %v433 = vadd.f32 %v419, %v425
        %v434 = vadd.f32 %v420, %v425
        %vm435 = vcmp.gt.f32.partialorder %v427, 0.0
        %vm436 = vcmp.gt.f32.partialorder %v428, 0.0
        %vm437 = vcmp.gt.f32.partialorder %v429, 0.0
        %vm438 = vcmp.gt.f32.partialorder %v430, 0.0
        %vm439 = vcmp.gt.f32.partialorder %v431, 0.0
        %vm440 = vcmp.gt.f32.partialorder %v432, 0.0
        %vm441 = vcmp.gt.f32.partialorder %v433, 0.0
        %vm442 = vcmp.gt.f32.partialorder %v434, 0.0
        %v443 = vmul.f32 %v427, 0.01
        %v444 = vmul.f32 %v428, 0.01
        %v445 = vmul.f32 %v429, 0.01
        %v446 = vmul.f32 %v430, 0.01
        %v447 = vmul.f32 %v431, 0.01
        %v448 = vmul.f32 %v432, 0.01
        %v449 = vmul.f32 %v433, 0.01
        %v450 = vmul.f32 %v434, 0.01
        %v451 = vsel %vm435, %v427, %v443
        %v452 = vsel %vm436, %v428, %v444
        %v453 = vsel %vm437, %v429, %v445
        %v454 = vsel %vm438, %v430, %v446
        %v455 = vsel %vm439, %v431, %v447
        %v456 = vsel %vm440, %v432, %v448
        %v457 = vsel %vm441, %v433, %v449
        %v458 = vsel %vm442, %v434, %v450
        %v459 = vpack.c.bf16 %v452, %v451
        %v460 = vpack.c.bf16 %v454, %v453
        %v461 = vpack.c.bf16 %v456, %v455
        %v462 = vpack.c.bf16 %v458, %v457
        %v463 = vld [vmem:[%s3] sm:$0xff]
        %v464 = vld [vmem:[%s3 + $0x8] sm:$0xff]
        %v465 = vld [vmem:[%s3 + $0x10] sm:$0xff]
        %v466 = vld [vmem:[%s3 + $0x18] sm:$0xff]
        %v467 = vld [vmem:[%s3 + $0x20] sm:$0xff]
        %v468 = vld [vmem:[%s3 + $0x28] sm:$0xff]
        %v469 = vld [vmem:[%s3 + $0x30] sm:$0xff]
        %v470 = vld [vmem:[%s3 + $0x38] sm:$0xff]
        %v471 = vld [vmem:[%s4] sm:$0x3]
        %v473 = vlaneseq
        %v474 = vshrl.u32 %v473, 7
        %v475 = vsub.s32 0, %v474
        %v476 = vrot.slane %v471, %v475
        %v477 = vlaneseq
        %v478 = vshrl.u32 %v477, 7
        %v479 = vsub.s32 1, %v478
        %v480 = vrot.slane %v471, %v479
        %v491 = vunpack.c.l.b16 %v463
        %v492 = vunpack.c.h.b16 %v463
        %v493 = vunpack.c.l.b16 %v464
        %v494 = vunpack.c.h.b16 %v464
        %v495 = vunpack.c.l.b16 %v465
        %v496 = vunpack.c.h.b16 %v465
        %v497 = vunpack.c.l.b16 %v466
        %v498 = vunpack.c.h.b16 %v466
        %v499 = vunpack.c.l.b16 %v467
        %v500 = vunpack.c.h.b16 %v467
        %v501 = vunpack.c.l.b16 %v468
        %v502 = vunpack.c.h.b16 %v468
        %v503 = vunpack.c.l.b16 %v469
        %v504 = vunpack.c.h.b16 %v469
        %v505 = vunpack.c.l.b16 %v470
        %v506 = vunpack.c.h.b16 %v470
        %v507 = vpack.c.b16 %v493, %v491
        %v508 = vpack.c.b16 %v494, %v492
        %v509 = vpack.c.b16 %v497, %v495
        %v510 = vpack.c.b16 %v498, %v496
        %v511 = vpack.c.b16 %v501, %v499
        %v512 = vpack.c.b16 %v502, %v500
        %v513 = vpack.c.b16 %v505, %v503
        %v514 = vpack.c.b16 %v506, %v504
        %vm523 = vcmask 523264
        %v525 = vsel %vm523, %v459, 0
        %v528 = vsel %vm523, %v460, 0
        %v531 = vsel %vm523, %v461, 0
        %v534 = vsel %vm523, %v462, 0
        %536 = vmatprep.subr.bf16.mxu0 %v508
        %537 = vmatpush1.bf16.msra.mxu0 %v507
        %538 = vmatprep.subr.bf16.mxu0 %v510
        %539 = vmatpush1.bf16.msra.mxu0 %v509
        %540 = vmatprep.subr.bf16.mxu0 %v512
        %541 = vmatpush1.bf16.msra.mxu0 %v511
        %542 = vmatprep.subr.bf16.mxu0 %v514
        %543 = vmatpush1.bf16.msra.mxu0 %v513
        %544 = vmatprep.subr.bf16.mxu0 0
        %545 = vmatpush1.bf16.msra.mxu0 0
        %546 = vmatprep.subr.bf16.mxu0 0
        %547 = vmatpush1.bf16.msra.mxu0 0
        %548 = vmatprep.subr.bf16.mxu0 0
        %549 = vmatpush1.bf16.msra.mxu0 0
        %550 = vmatprep.subr.bf16.mxu0 0
        %551 = vmatpush1.bf16.msra.mxu0 0
        %552 = vmatprep.subr.bf16.mxu0 0
        %553 = vmatpush1.bf16.msra.mxu0 0
        %554 = vmatprep.subr.bf16.mxu0 0
        %555 = vmatpush1.bf16.msra.mxu0 0
        %556 = vmatprep.subr.bf16.mxu0 0
        %557 = vmatpush1.bf16.msra.mxu0 0
        %558 = vmatprep.subr.bf16.mxu0 0
        %559 = vmatpush1.bf16.msra.mxu0 0
        %560 = vmatprep.subr.bf16.mxu0 0
        %561 = vmatpush1.bf16.msra.mxu0 0
        %562 = vmatprep.subr.bf16.mxu0 0
        %563 = vmatpush1.bf16.msra.mxu0 0
        %564 = vmatprep.subr.bf16.mxu0 0
        %565 = vmatpush1.bf16.msra.mxu0 0
        %566 = vmatprep.subr.bf16.mxu0 0
        %567 = vmatpush1.bf16.msra.mxu0 0
        %568 = vmatprep.mubr.bf16.mxu0 0
        %569 = vmatmul.mubr.bf16.gmra.mrb[0].mxu0 %v525
        %v570 = vpop.f32.mrb[0].mxu0
        %v571 = vadd.f32 %v476, %v570
        %v572 = vpop.f32.mrb[0].mxu0
        %v573 = vadd.f32 %v480, %v572
        %v574 = vpop.f32.mrb[0].mxu0
        %v575 = vadd.f32 %v476, %v574
        %v576 = vpop.f32.mrb[0].mxu0
        %v577 = vadd.f32 %v480, %v576
        %578 = vmatprep.mubr.bf16.mxu0 0
        %579 = vmatmul.mubr.bf16.gmra.mrb[0].mxu0 %v528
        %v580 = vpop.f32.mrb[0].mxu0
        %v581 = vadd.f32 %v476, %v580
        %v582 = vpop.f32.mrb[0].mxu0
        %v583 = vadd.f32 %v480, %v582
        %v584 = vpop.f32.mrb[0].mxu0
        %v585 = vadd.f32 %v476, %v584
        %v586 = vpop.f32.mrb[0].mxu0
        %v587 = vadd.f32 %v480, %v586
        %588 = vmatprep.mubr.bf16.mxu0 0
        %589 = vmatmul.mubr.bf16.gmra.mrb[0].mxu0 %v531
        %v590 = vpop.f32.mrb[0].mxu0
        %v591 = vadd.f32 %v476, %v590
        %v592 = vpop.f32.mrb[0].mxu0
        %v593 = vadd.f32 %v480, %v592
        %v594 = vpop.f32.mrb[0].mxu0
        %v595 = vadd.f32 %v476, %v594
        %v596 = vpop.f32.mrb[0].mxu0
        %v597 = vadd.f32 %v480, %v596
        %598 = vmatprep.mubr.bf16.mxu0 0
        %599 = vmatmul.mubr.bf16.gmra.mrb[0].mxu0 %v534
        %v600 = vpop.f32.mrb[0].mxu0
        %v601 = vadd.f32 %v476, %v600
        %v602 = vpop.f32.mrb[0].mxu0
        %v603 = vadd.f32 %v480, %v602
        %v604 = vpop.f32.mrb[0].mxu0
        %v605 = vadd.f32 %v476, %v604
        %v606 = vpop.f32.mrb[0].mxu0
        %v607 = vadd.f32 %v480, %v606
        %608 = vdwg.mxu0
        %v609 = vpack.c.bf16 %v575, %v571
        %v610 = vpack.c.bf16 %v577, %v573
        %v611 = vpack.c.bf16 %v585, %v581
        %v612 = vpack.c.bf16 %v587, %v583
        %v613 = vpack.c.bf16 %v595, %v591
        %v614 = vpack.c.bf16 %v597, %v593
        %v615 = vpack.c.bf16 %v605, %v601
        %v616 = vpack.c.bf16 %v607, %v603
        %v625 = vunpack.c.l.b16 %v609
        %v626 = vunpack.c.l.b16 %v610
        %v627 = vunpack.c.h.b16 %v609
        %v628 = vunpack.c.h.b16 %v610
        %v629 = vunpack.c.l.b16 %v611
        %v630 = vunpack.c.l.b16 %v612
        %v631 = vunpack.c.h.b16 %v611
        %v632 = vunpack.c.h.b16 %v612
        %v633 = vunpack.c.l.b16 %v613
        %v634 = vunpack.c.l.b16 %v614
        %v635 = vunpack.c.h.b16 %v613
        %v636 = vunpack.c.h.b16 %v614
        %v637 = vunpack.c.l.b16 %v615
        %v638 = vunpack.c.l.b16 %v616
        %v639 = vunpack.c.h.b16 %v615
        %v640 = vunpack.c.h.b16 %v616
        %v641 = vpack.c.b16 %v626, %v625
        %v642 = vpack.c.b16 %v628, %v627
        %v643 = vpack.c.b16 %v630, %v629
        %v644 = vpack.c.b16 %v632, %v631
        %v645 = vpack.c.b16 %v634, %v633
        %v646 = vpack.c.b16 %v636, %v635
        %v647 = vpack.c.b16 %v638, %v637
        %v648 = vpack.c.b16 %v640, %v639
        %657 = vst [vmem:[%s242] sm:$0xff] %v641
        %658 = vst [vmem:[%s242 + $0x8] sm:$0xff] %v642
        %659 = vst [vmem:[%s242 + $0x10] sm:$0xff] %v643
        %660 = vst [vmem:[%s242 + $0x18] sm:$0xff] %v644
        %661 = vst [vmem:[%s242 + $0x20] sm:$0xff] %v645
        %662 = vst [vmem:[%s242 + $0x28] sm:$0xff] %v646
        %663 = vst [vmem:[%s242 + $0x30] sm:$0xff] %v647
        %664 = vst [vmem:[%s242 + $0x38] sm:$0xff] %v648
        %s665 = sand.u32 %s153, 1
        %s666 = scalar_lea.sflag [#allocation3], %s665
        %s667 = sand.u32 %s153, 1
        %s668 = smul.addr %s667, 64
        %s669 = scalar_lea.vmem [#allocation2], %s668
        // Predicated region
        $region41: #{tpu_custom_call.1} parent=39 // pred_check
          %p670 = pneg %p163
        $region42: #{tpu_custom_call.1} parent=39 // pred_check_branch
          %672 = sbr.rel (%p670) target = $region44
        $region43: #{tpu_custom_call.1} parent=39 // pred_region
          %s673 = smul.u32 8, %s24
          %s675 = ssub.s32 1024, 1024
          %676 = vsyncadd %s666, %s675
          %s677 = smul.addr %s673, 2
          %s678 = smul.addr %s23, 32
          %s679 = sadd.s32 %s677, %s678
          %s680 = smul.addr %s679, 64
          %s681 = scalar_lea.hbm %s5, %s680
          %s682 = sshll.u32 %s669, 4
          %s683 = int_to_ptr.vmem [resolvable:$true] %s682
          %688 = dma.vmem_to_hbm [thread:$0]  %s683, 1024, %s681, %s666, 128, 128, 8
        $region44: #{tpu_custom_call.1} parent=39 // pred_fallthru
          _
      $region40: #{tpu_custom_call.1} parent=5 // pred_fallthru
        _
      %p689 = scmp.le.s32.totalorder 2, %s14
      // Predicated region
      $region45: #{tpu_custom_call.1} parent=5 // pred_check
        %p690 = pneg %p689
      $region46: #{tpu_custom_call.1} parent=5 // pred_check_branch
        %692 = sbr.rel (%p690) target = $region48
      $region47: #{tpu_custom_call.1} parent=5 // pred_region
        %s693 = ssub.s32 %s14, 2
        // Predicated region
        $region49: #{tpu_custom_call.1} parent=47 // pred_check
          %p694 = pneg %p169
        $region50: #{tpu_custom_call.1} parent=47 // pred_check_branch
          %696 = sbr.rel (%p694) target = $region52
        $region51: #{tpu_custom_call.1} parent=47 // pred_region
          %s697 = sand.u32 %s154, 1
          %s698 = scalar_lea.sflag [#allocation3], %s697
          %s699 = sand.u32 %s154, 1
          %s700 = smul.addr %s699, 64
          %s701 = scalar_lea.vmem [#allocation2], %s700
          %702 = dma.done %s698, 1024
        $region52: #{tpu_custom_call.1} parent=47 // pred_fallthru
          _
      $region48: #{tpu_custom_call.1} parent=5 // pred_fallthru
        _
    $region6: #{tpu_custom_call.1} parent=1 // loop_footer
      %s18 = sadd.s32 1, %s14
    $region7: #{tpu_custom_call.1} parent=1 // loop_footer_branch
      %13 = sbr.rel target = $region3
    $region8: #{tpu_custom_call.1} parent=1 // loop_exit
      _
    %703 = vsyncpa [#allocation3], 1
    %s704 = scalar_lea.sflag [#allocation3], 1
    %705 = vsyncpa %s704, 1

</llo_original>
